<compile_context>
chip_gen: v6e
topology: v6e:2x2x1
jax: 0.10.0
libtpu: 0.0.40
codegen_flags: <defaults>
</compile_context>

<pallas_src>
import functools

import jax
import jax.numpy as jnp
from jax import lax
from jax.experimental import pallas as pl
from jax.experimental.pallas import tpu as pltpu


# ---------------------------------------------------------------------------
# Pallas kernel: fused 3-tap convs (single MXU matmul each) + LSTM gate math
# ---------------------------------------------------------------------------
def _convlstm_grad_kernel(inv_gn_ref,            # SMEM (1, 1) f32   : 1 / grad_norm
                          gx_ref,                # (R, Cin) f32      : R = block_batch * T_pad rows
                          w_eg_ref, b_eg_ref,    # (3*Cin, H) mm,  (1, H) f32
                          w_gm_ref, b_gm_ref,    # (3*H, 3H)  mm,  (1, 3H) f32
                          w_g2_ref, b_g2_ref,    # (3*H, 3H)  mm,  (1, 3H) f32
                          out_ref,               # (R, H) f32
                          *, seq_len, seq_stride, nonlin_dtype):
    R = gx_ref.shape[0]
    H = b_eg_ref.shape[-1]
    mm_dtype = w_eg_ref.dtype

    inv_gn = inv_gn_ref[0, 0]
    g = gx_ref[...].astype(jnp.float32) * inv_gn          # normalized grad (f32)

    # Row position inside its (padded) length-seq_stride sequence.
    row = lax.broadcasted_iota(jnp.int32, (R, 1), 0)
    t = row % seq_stride
    prev_ok = (t >= 1) & (t < seq_len)         # mask rolls at sequence starts / pad rows
    next_ok = t < (seq_len - 1)                # mask rolls at sequence ends

    def taps_mm(v):
        # (R, C) f32 -> (R, 3C) mm_dtype: [v[t-1] | v[t] | v[t+1]], zero at seq edges.
        # Pieces are cast to mm_dtype BEFORE concat -> one bf16 buffer, no f32 concat.
        prev = jnp.where(prev_ok, pltpu.roll(v, 1, axis=0), 0.0)
        nxt = jnp.where(next_ok, pltpu.roll(v, R - 1, axis=0), 0.0)
        return jnp.concatenate(
            [prev.astype(mm_dtype), v.astype(mm_dtype), nxt.astype(mm_dtype)],
            axis=-1)

    def conv3(x3, w_ref, b_ref):
        # 3-tap temporal conv as ONE MXU matmul (bf16 inputs, f32 accumulate).
        return jnp.dot(x3, w_ref[...], preferred_element_type=jnp.float32) + b_ref[...]

    def lstm_zero_state(x3, w_ref, b_ref):
        # Gate columns pre-ordered [in | out | cell]; remember gate dropped
        # (prev cell == 0 so it is dead compute).  Nonlinearities optionally in
        # bf16 (EUP relief on v6e/v7x); cell/output math stays f32.
        gates = conv3(x3, w_ref, b_ref).astype(nonlin_dtype)   # (R, 3H)
        sig = jax.nn.sigmoid(gates[:, :2 * H]).astype(jnp.float32)
        cell_g = jnp.tanh(gates[:, 2 * H:]).astype(jnp.float32)
        in_g, out_g = sig[:, :H], sig[:, H:]
        cell = in_g * cell_g                                    # prev cell == 0
        return out_g * jnp.tanh(cell.astype(nonlin_dtype)).astype(jnp.float32)

    e = conv3(taps_mm(g), w_eg_ref, b_eg_ref)                  # encoder_grad
    taps_e = taps_mm(e)                                         # built once
    taps_e2 = taps_e * taps_e                                   # taps(e^2) == taps(e)^2
    h_m = lstm_zero_state(taps_e, w_gm_ref, b_gm_ref)
    h_2 = lstm_zero_state(taps_e2, w_g2_ref, b_g2_ref)

    # h_m / sqrt(sigmoid(h_2)) == h_m * sqrt(1 + exp(-h_2))  (exact; one EUP pass fewer)
    out = h_m * jnp.sqrt(1.0 + jnp.exp(-h_2))
    out_ref[...] = out.astype(out_ref.dtype)


# ---------------------------------------------------------------------------
# Parameter plumbing (PyTorch Conv2d shapes -> effective kernel weights)
# ---------------------------------------------------------------------------
def make_params(key, dim_in, dim_hidden, kernel_size=3):
    """Deterministic synthetic parameters with PyTorch Conv2d shapes."""
    ks = jax.random.split(key, 6)
    H = dim_hidden
    scale = 0.1
    return {
        "W_enc_grad": scale * jax.random.normal(ks[0], (H, dim_in, kernel_size, kernel_size), jnp.float32),
        "b_enc_grad": scale * jax.random.normal(ks[1], (H,), jnp.float32),
        "W_gates_m": scale * jax.random.normal(ks[2], (4 * H, 2 * H, kernel_size, kernel_size), jnp.float32),
        "b_gates_m": scale * jax.random.normal(ks[3], (4 * H,), jnp.float32),
        "W_gates_2": scale * jax.random.normal(ks[4], (4 * H, 2 * H, kernel_size, kernel_size), jnp.float32),
        "b_gates_2": scale * jax.random.normal(ks[5], (4 * H,), jnp.float32),
    }


def _effective_weights(params, dim_hidden, mm_dtype):
    """(Cout, Cin, 3, 3) PyTorch weights -> (3*Cin_eff, Cout) matmul weights.

    W == 1 => only kw == 1; zero hidden state => only first H input channels of
    the gate convs; zero cell state => remember gate dropped; live gates
    reordered to [in | out | cell]."""
    H = dim_hidden

    def conv_w(W):
        w = jnp.transpose(W[:, :, :, 1], (2, 1, 0))       # (3, Cin, Cout), tap-major
        return w.reshape(-1, w.shape[-1])                 # (3*Cin, Cout)

    def live_gates(a, axis=0):
        parts = jnp.split(a, 4, axis=axis)                # [in, remember, out, cell]
        return jnp.concatenate([parts[0], parts[2], parts[3]], axis=axis)

    w_eg = conv_w(params["W_enc_grad"]).astype(mm_dtype)                       # (3*Cin, H)
    b_eg = params["b_enc_grad"].reshape(1, -1).astype(jnp.float32)             # (1, H)
    w_gm = conv_w(live_gates(params["W_gates_m"][:, :H])).astype(mm_dtype)     # (3H, 3H)
    b_gm = live_gates(params["b_gates_m"]).reshape(1, -1).astype(jnp.float32)  # (1, 3H)
    w_g2 = conv_w(live_gates(params["W_gates_2"][:, :H])).astype(mm_dtype)     # (3H, 3H)
    b_g2 = live_gates(params["b_gates_2"]).reshape(1, -1).astype(jnp.float32)  # (1, 3H)
    return w_eg, b_eg, w_gm, b_gm, w_g2, b_g2


def _chip_defaults():
    """Chip-gated defaults: (nonlin_dtype, vmem_limit_bytes).

    bf16 EUP is a win on v6e/v7x only (v5e has no bf16 EUP/VPU and is MXU-bound
    for this kernel anyway).  The VMEM limit is raised only on recognized chips."""
    kind = ""
    try:
        kind = jax.devices()[0].device_kind.lower()
    except Exception:
        pass
    if "v7" in kind:
        return jnp.bfloat16, 40 * 1024 * 1024      # 64 MiB physical; leave headroom
    if "v6" in kind:
        return jnp.bfloat16, 96 * 1024 * 1024
    if "v5" in kind:
        return jnp.float32, 96 * 1024 * 1024
    return jnp.float32, None


# ---------------------------------------------------------------------------
# Wrapper
# ---------------------------------------------------------------------------
def rearranged_convlstm_grad_forward(x, grad_x, gradients, params, dim_hidden,
                                     *, matmul_dtype=jnp.bfloat16,
                                     nonlin_dtype=None,
                                     target_block_rows=1024,
                                     vmem_limit_bytes=None,
                                     output_layout="bct"):
    """x, grad_x: (B, dim_in, T) as in PyTorch ('b c t').

    Returns (out, gradients) with out: (B, dim_hidden, T) for output_layout="bct"
    (PyTorch-identical), or (B, T, dim_hidden) for output_layout="btc"
    (skips the post-kernel HBM-roundtrip transpose)."""
    del x  # encoder(x)/decoder do not influence the module output.
    B, _, T = grad_x.shape
    H = dim_hidden

    if nonlin_dtype is None or vmem_limit_bytes is None:
        d_nl, d_vm = _chip_defaults()
        if nonlin_dtype is None:
            nonlin_dtype = d_nl
        if vmem_limit_bytes is None:
            vmem_limit_bytes = d_vm

    w_eg, b_eg, w_gm, b_gm, w_g2, b_g2 = _effective_weights(params, H, matmul_dtype)

    gx = grad_x.astype(jnp.float32)
    # grad-norm hoisted out of the kernel (plain-JAX reduction, computed on the
    # UNPADDED input); 1/norm enters the kernel as an SMEM scalar so the kernel
    # runs as a batch-parallel grid.
    inv_gn = (1.0 / jnp.sqrt(jnp.mean(gx * gx))).reshape(1, 1)

    # Pad the time axis to a sublane multiple so the batch-parallel grid
    # survives any T (true T is masked in-kernel via seq_len vs seq_stride).
    T_pad = ((T + 7) // 8) * 8
    if T_pad != T:
        gx = jnp.pad(gx, ((0, 0), (0, 0), (0, T_pad - T)))

    # Batch-block size: fold several sequences into one matmul M dim; guarantee
    # >= 2 grid blocks whenever B > 1 so v7x's two TensorCores both get work.
    bb = min(B, max(1, target_block_rows // T_pad))
    if B > 1:
        bb = min(bb, -(-B // 2))
    num_blocks = -(-B // bb)
    b_pad = num_blocks * bb
    if b_pad != B:
        gx = jnp.pad(gx, ((0, b_pad - B), (0, 0), (0, 0)))

    # channels-last, batch folded into rows: (B_pad*T_pad, Cin)
    g_flat = jnp.transpose(gx, (0, 2, 1)).reshape(b_pad * T_pad, -1)
    rows_per_block = bb * T_pad
    # Guard against cross-sequence leakage through pltpu.roll wraparound.
    assert rows_per_block % T_pad == 0
    cin = g_flat.shape[1]
    # NOTE: the (rows, cin~4) input block is lane-sparse; fine at dim_in=4,
    # pre-pack taps host-side if dim_in grows and the input DMA shows exposed.

    kernel = functools.partial(_convlstm_grad_kernel, seq_len=T,
                               seq_stride=T_pad, nonlin_dtype=nonlin_dtype)
    cp_kwargs = dict(dimension_semantics=("parallel",))
    if vmem_limit_bytes is not None:
        cp_kwargs["vmem_limit_bytes"] = int(vmem_limit_bytes)

    out_flat = pl.pallas_call(
        kernel,
        out_shape=jax.ShapeDtypeStruct((b_pad * T_pad, H), jnp.float32),
        grid=(num_blocks,),
        in_specs=[
            pl.BlockSpec(memory_space=pltpu.MemorySpace.SMEM),            # inv_gn scalar
            pl.BlockSpec((rows_per_block, cin), lambda i: (i, 0)),        # grad rows
            # Weights/biases are grid-resident (constant index_map).
            # TODO(synk): on v7x at large H, single-buffer these (pl.Buffered(1)
            # pipeline_mode or a one-shot DMA into scratch) to reclaim the dead
            # double-buffer VMEM for larger row slabs.
            pl.BlockSpec(w_eg.shape, lambda i: (0, 0)),
            pl.BlockSpec(b_eg.shape, lambda i: (0, 0)),
            pl.BlockSpec(w_gm.shape, lambda i: (0, 0)),
            pl.BlockSpec(b_gm.shape, lambda i: (0, 0)),
            pl.BlockSpec(w_g2.shape, lambda i: (0, 0)),
            pl.BlockSpec(b_g2.shape, lambda i: (0, 0)),
        ],
        out_specs=pl.BlockSpec((rows_per_block, H), lambda i: (i, 0)),    # lane-dense slab
        compiler_params=pltpu.CompilerParams(**cp_kwargs),
    )(inv_gn, g_flat, w_eg, b_eg, w_gm, b_gm, w_g2, b_g2)

    out = out_flat.reshape(b_pad, T_pad, H)[:B, :T]                       # (B, T, H)
    if output_layout == "btc":
        return out, gradients
    # 'b c t' (PyTorch layout).  This transpose is an extra HBM round-trip of
    # the largest tensor; prefer output_layout="btc" when the consumer accepts
    # channels-last, or in-kernel (H, T) stores when T >= 128.
    return jnp.transpose(out, (0, 2, 1)), gradients


# ---------------------------------------------------------------------------
# Pure-JAX reference (NCHW conv, full 3x3 weights, all 4 gates, f32)
# ---------------------------------------------------------------------------
def reference_forward(grad_x, params, dim_hidden):
    H = dim_hidden
    gx = grad_x[..., None].astype(jnp.float32)                            # (B, C, T, 1)
    gn = jnp.sqrt(jnp.mean(gx ** 2))
    g = gx / gn

    def conv(x, W, b):
        y = jax.lax.conv_general_dilated(
            x, W, window_strides=(1, 1), padding=((1, 1), (1, 1)),
            dimension_numbers=("NCHW", "OIHW", "NCHW"))
        return y + b[None, :, None, None]

    e = conv(g, params["W_enc_grad"], params["b_enc_grad"])
    B, _, T, _ = e.shape
    zeros_state = jnp.zeros((B, H, T, 1), jnp.float32)

    def lstm(inp, W, b):
        gates = conv(jnp.concatenate([inp, zeros_state], axis=1), W, b)
        ig, rg, og, cg = jnp.split(gates, 4, axis=1)
        ig, rg, og = map(jax.nn.sigmoid, (ig, rg, og))
        cg = jnp.tanh(cg)
        cell = rg * zeros_state + ig * cg
        return og * jnp.tanh(cell)

    h_m = lstm(e, params["W_gates_m"], params["b_gates_m"])
    h_2 = lstm(e ** 2, params["W_gates_2"], params["b_gates_2"])
    out = h_m / jnp.sqrt(jax.nn.sigmoid(h_2))
    return out[..., 0]                                                    # (B, H, T)


if __name__ == "__main__":
    B, dim_in, T, dim_hidden = 2, 4, 16, 32

    key = jax.random.PRNGKey(0)
    k_params, k_x, k_g, k_grads = jax.random.split(key, 4)

    params = make_params(k_params, dim_in, dim_hidden)
    x = jax.random.normal(k_x, (B, dim_in, T), jnp.float32)
    grad_x = jax.random.normal(k_g, (B, dim_in, T), jnp.float32)
    gradients = jax.random.normal(k_grads, (B, dim_in, T), jnp.float32)

    nonlin_dtype, vmem_limit = _chip_defaults()
    out, grads_out = rearranged_convlstm_grad_forward(
        x, grad_x, gradients, params, dim_hidden,
        nonlin_dtype=nonlin_dtype, vmem_limit_bytes=vmem_limit)
    out = jax.block_until_ready(out)

    ref = jax.block_until_ready(reference_forward(grad_x, params, dim_hidden))

    assert out.shape == (B, dim_hidden, T), out.shape
    assert bool(jnp.all(jnp.isfinite(out)))
    # bf16 MXU inputs (f32 accumulation); slightly looser when the gate
    # nonlinearities also run in bf16 (v6e/v7x path).
    if nonlin_dtype is jnp.bfloat16:
        rtol, atol = 6e-2, 2e-2
    else:
        rtol, atol = 3e-2, 8e-3
    assert bool(jnp.allclose(out, ref, rtol=rtol, atol=atol)), (
        float(jnp.max(jnp.abs(out - ref))))
    assert bool(jnp.array_equal(grads_out, gradients))

    print("KERNEL_OK")
</pallas_src>

<mosaic_0001>
module attributes {stable_mosaic.version = 11 : i64} {
  func.func @_convlstm_grad_kernel(%arg0: i32, %arg1: memref<1x1xf32, #tpu.memory_space<smem>>, %arg2: memref<16x4xf32, #tpu.memory_space<vmem>>, %arg3: memref<12x32xbf16, #tpu.memory_space<vmem>>, %arg4: memref<1x32xf32, #tpu.memory_space<vmem>>, %arg5: memref<96x96xbf16, #tpu.memory_space<vmem>>, %arg6: memref<1x96xf32, #tpu.memory_space<vmem>>, %arg7: memref<96x96xbf16, #tpu.memory_space<vmem>>, %arg8: memref<1x96xf32, #tpu.memory_space<vmem>>, %arg9: memref<16x32xf32, #tpu.memory_space<vmem>>) attributes {dimension_semantics = [#tpu.dimension_semantics<parallel>], iteration_bounds = array<i64: 2>, scalar_prefetch = 0 : i64, scratch_operands = 0 : i64, tpu.core_type = #tpu.core_type<tc>, window_params = [{transform_indices = @transform_0, window_bounds = array<i64: 1, 1>}, {transform_indices = @transform_1, window_bounds = array<i64: 16, 4>}, {pipeline_mode = #tpu.pipeline_mode<synchronous>, transform_indices = @transform_2, window_bounds = array<i64: 12, 32>}, {pipeline_mode = #tpu.pipeline_mode<synchronous>, transform_indices = @transform_3, window_bounds = array<i64: 1, 32>}, {pipeline_mode = #tpu.pipeline_mode<synchronous>, transform_indices = @transform_4, window_bounds = array<i64: 96, 96>}, {pipeline_mode = #tpu.pipeline_mode<synchronous>, transform_indices = @transform_5, window_bounds = array<i64: 1, 96>}, {pipeline_mode = #tpu.pipeline_mode<synchronous>, transform_indices = @transform_6, window_bounds = array<i64: 96, 96>}, {pipeline_mode = #tpu.pipeline_mode<synchronous>, transform_indices = @transform_7, window_bounds = array<i64: 1, 96>}, {transform_indices = @transform_8, window_bounds = array<i64: 16, 32>}]} {
    %c0 = arith.constant 0 : index
    %c0_0 = arith.constant 0 : index
    %0 = memref.load %arg1[%c0, %c0_0] : memref<1x1xf32, #tpu.memory_space<smem>>
    %c0_1 = arith.constant 0 : index
    %c0_2 = arith.constant 0 : index
    %1 = vector.load %arg2[%c0_1, %c0_2] : memref<16x4xf32, #tpu.memory_space<vmem>>, vector<16x4xf32>
    %2 = vector.broadcast %0 : f32 to vector<16x4xf32>
    %3 = arith.mulf %1, %2 : vector<16x4xf32>
    %4 = tpu.iota {dimensions = array<i32: 0>} : vector<16x1xi32>
    %c16_i32 = arith.constant 16 : i32
    %c0_i32 = arith.constant 0 : i32
    %5 = arith.cmpi eq, %c16_i32, %c0_i32 : i32
    %c1_i32 = arith.constant 1 : i32
    %6 = arith.select %5, %c1_i32, %c16_i32 : i32
    %7 = vector.broadcast %6 : i32 to vector<16x1xi32>
    %8 = arith.remsi %4, %7 : vector<16x1xi32>
    %c0_i32_3 = arith.constant 0 : i32
    %9 = vector.broadcast %c0_i32_3 : i32 to vector<16x1xi32>
    %10 = arith.cmpi ne, %8, %9 : vector<16x1xi32>
    %c0_i32_4 = arith.constant 0 : i32
    %11 = vector.broadcast %c0_i32_4 : i32 to vector<16x1xi32>
    %12 = arith.cmpi slt, %8, %11 : vector<16x1xi32>
    %c0_i32_5 = arith.constant 0 : i32
    %13 = arith.cmpi slt, %6, %c0_i32_5 : i32
    %14 = vector.broadcast %13 : i1 to vector<16x1xi1>
    %15 = vector.broadcast %14 : vector<16x1xi1> to vector<16x1xi1>
    %16 = arith.xori %12, %15 : vector<16x1xi1>
    %17 = arith.andi %16, %10 : vector<16x1xi1>
    %18 = vector.broadcast %6 : i32 to vector<16x1xi32>
    %19 = arith.addi %8, %18 : vector<16x1xi32>
    %20 = arith.select %17, %19, %8 : vector<16x1xi1>, vector<16x1xi32>
    %c1_i32_6 = arith.constant 1 : i32
    %21 = vector.broadcast %c1_i32_6 : i32 to vector<16x1xi32>
    %22 = arith.cmpi sge, %20, %21 : vector<16x1xi32>
    %c16_i32_7 = arith.constant 16 : i32
    %23 = vector.broadcast %c16_i32_7 : i32 to vector<16x1xi32>
    %24 = arith.cmpi slt, %20, %23 : vector<16x1xi32>
    %25 = arith.andi %22, %24 : vector<16x1xi1>
    %c15_i32 = arith.constant 15 : i32
    %26 = vector.broadcast %c15_i32 : i32 to vector<16x1xi32>
    %27 = arith.cmpi slt, %20, %26 : vector<16x1xi32>
    %c1_i32_8 = arith.constant 1 : i32
    %28 = tpu.dynamic_rotate %3 by %c1_i32_8 dim 0 : vector<16x4xf32>, i32 -> vector<16x4xf32>
    %cst = arith.constant 0.000000e+00 : f32
    %29 = vector.shape_cast %25 : vector<16x1xi1> to vector<16x1xi1>
    %30 = vector.broadcast %29 : vector<16x1xi1> to vector<16x4xi1>
    %31 = vector.broadcast %cst : f32 to vector<16x4xf32>
    %32 = arith.select %30, %28, %31 : vector<16x4xi1>, vector<16x4xf32>
    %c15_i32_9 = arith.constant 15 : i32
    %33 = tpu.dynamic_rotate %3 by %c15_i32_9 dim 0 : vector<16x4xf32>, i32 -> vector<16x4xf32>
    %cst_10 = arith.constant 0.000000e+00 : f32
    %34 = vector.shape_cast %27 : vector<16x1xi1> to vector<16x1xi1>
    %35 = vector.broadcast %34 : vector<16x1xi1> to vector<16x4xi1>
    %36 = vector.broadcast %cst_10 : f32 to vector<16x4xf32>
    %37 = arith.select %35, %33, %36 : vector<16x4xi1>, vector<16x4xf32>
    %38 = arith.truncf %32 : vector<16x4xf32> to vector<16x4xbf16>
    %39 = arith.truncf %3 : vector<16x4xf32> to vector<16x4xbf16>
    %40 = arith.truncf %37 : vector<16x4xf32> to vector<16x4xbf16>
    %41 = tpu.concatenate %38, %39, %40 in 1 : vector<16x4xbf16>, vector<16x4xbf16>, vector<16x4xbf16> -> vector<16x12xbf16>
    %c0_11 = arith.constant 0 : index
    %c0_12 = arith.constant 0 : index
    %42 = vector.load %arg3[%c0_11, %c0_12] : memref<12x32xbf16, #tpu.memory_space<vmem>>, vector<12x32xbf16>
    %cst_13 = arith.constant dense<0.000000e+00> : vector<16x32xf32>
    %43 = tpu.matmul %41, %42, %cst_13 {dimension_numbers = #tpu.dot_dimension_numbers<[1], [0], [0], [1], [0, 0, 1, 1], [], []>} : vector<16x12xbf16>, vector<12x32xbf16>, vector<16x32xf32> -> vector<16x32xf32>
    %c0_14 = arith.constant 0 : index
    %c0_15 = arith.constant 0 : index
    %44 = vector.load %arg4[%c0_14, %c0_15] : memref<1x32xf32, #tpu.memory_space<vmem>>, vector<1x32xf32>
    %45 = vector.broadcast %44 : vector<1x32xf32> to vector<16x32xf32>
    %46 = arith.addf %43, %45 : vector<16x32xf32>
    %c1_i32_16 = arith.constant 1 : i32
    %47 = tpu.dynamic_rotate %46 by %c1_i32_16 dim 0 : vector<16x32xf32>, i32 -> vector<16x32xf32>
    %cst_17 = arith.constant 0.000000e+00 : f32
    %48 = vector.shape_cast %25 : vector<16x1xi1> to vector<16x1xi1>
    %49 = vector.broadcast %48 : vector<16x1xi1> to vector<16x32xi1>
    %50 = vector.broadcast %cst_17 : f32 to vector<16x32xf32>
    %51 = arith.select %49, %47, %50 : vector<16x32xi1>, vector<16x32xf32>
    %c15_i32_18 = arith.constant 15 : i32
    %52 = tpu.dynamic_rotate %46 by %c15_i32_18 dim 0 : vector<16x32xf32>, i32 -> vector<16x32xf32>
    %cst_19 = arith.constant 0.000000e+00 : f32
    %53 = vector.shape_cast %27 : vector<16x1xi1> to vector<16x1xi1>
    %54 = vector.broadcast %53 : vector<16x1xi1> to vector<16x32xi1>
    %55 = vector.broadcast %cst_19 : f32 to vector<16x32xf32>
    %56 = arith.select %54, %52, %55 : vector<16x32xi1>, vector<16x32xf32>
    %57 = arith.truncf %51 : vector<16x32xf32> to vector<16x32xbf16>
    %58 = arith.truncf %46 : vector<16x32xf32> to vector<16x32xbf16>
    %59 = arith.truncf %56 : vector<16x32xf32> to vector<16x32xbf16>
    %60 = tpu.concatenate %57, %58, %59 in 1 : vector<16x32xbf16>, vector<16x32xbf16>, vector<16x32xbf16> -> vector<16x96xbf16>
    %61 = arith.mulf %60, %60 : vector<16x96xbf16>
    %c0_20 = arith.constant 0 : index
    %c0_21 = arith.constant 0 : index
    %62 = vector.load %arg5[%c0_20, %c0_21] : memref<96x96xbf16, #tpu.memory_space<vmem>>, vector<96x96xbf16>
    %cst_22 = arith.constant dense<0.000000e+00> : vector<16x96xf32>
    %63 = tpu.matmul %60, %62, %cst_22 {dimension_numbers = #tpu.dot_dimension_numbers<[1], [0], [0], [1], [0, 0, 1, 1], [], []>} : vector<16x96xbf16>, vector<96x96xbf16>, vector<16x96xf32> -> vector<16x96xf32>
    %c0_23 = arith.constant 0 : index
    %c0_24 = arith.constant 0 : index
    %64 = vector.load %arg6[%c0_23, %c0_24] : memref<1x96xf32, #tpu.memory_space<vmem>>, vector<1x96xf32>
    %65 = vector.broadcast %64 : vector<1x96xf32> to vector<16x96xf32>
    %66 = arith.addf %63, %65 : vector<16x96xf32>
    %67 = vector.extract_strided_slice %66 {offsets = [0, 0], sizes = [16, 64], strides = [1, 1]} : vector<16x96xf32> to vector<16x64xf32>
    %68 = arith.negf %67 : vector<16x64xf32>
    %69 = math.exp %68 : vector<16x64xf32>
    %cst_25 = arith.constant 1.000000e+00 : f32
    %70 = vector.broadcast %cst_25 : f32 to vector<16x64xf32>
    %71 = arith.addf %70, %69 : vector<16x64xf32>
    %72 = arith.divf %70, %71 : vector<16x64xf32>
    %73 = vector.extract_strided_slice %66 {offsets = [0, 64], sizes = [16, 32], strides = [1, 1]} : vector<16x96xf32> to vector<16x32xf32>
    %74 = math.tanh %73 : vector<16x32xf32>
    %75 = vector.extract_strided_slice %72 {offsets = [0, 0], sizes = [16, 32], strides = [1, 1]} : vector<16x64xf32> to vector<16x32xf32>
    %76 = vector.extract_strided_slice %72 {offsets = [0, 32], sizes = [16, 32], strides = [1, 1]} : vector<16x64xf32> to vector<16x32xf32>
    %77 = arith.mulf %75, %74 : vector<16x32xf32>
    %78 = math.tanh %77 : vector<16x32xf32>
    %79 = arith.mulf %76, %78 : vector<16x32xf32>
    %c0_26 = arith.constant 0 : index
    %c0_27 = arith.constant 0 : index
    %80 = vector.load %arg7[%c0_26, %c0_27] : memref<96x96xbf16, #tpu.memory_space<vmem>>, vector<96x96xbf16>
    %cst_28 = arith.constant dense<0.000000e+00> : vector<16x96xf32>
    %81 = tpu.matmul %61, %80, %cst_28 {dimension_numbers = #tpu.dot_dimension_numbers<[1], [0], [0], [1], [0, 0, 1, 1], [], []>} : vector<16x96xbf16>, vector<96x96xbf16>, vector<16x96xf32> -> vector<16x96xf32>
    %c0_29 = arith.constant 0 : index
    %c0_30 = arith.constant 0 : index
    %82 = vector.load %arg8[%c0_29, %c0_30] : memref<1x96xf32, #tpu.memory_space<vmem>>, vector<1x96xf32>
    %83 = vector.broadcast %82 : vector<1x96xf32> to vector<16x96xf32>
    %84 = arith.addf %81, %83 : vector<16x96xf32>
    %85 = vector.extract_strided_slice %84 {offsets = [0, 0], sizes = [16, 64], strides = [1, 1]} : vector<16x96xf32> to vector<16x64xf32>
    %86 = arith.negf %85 : vector<16x64xf32>
    %87 = math.exp %86 : vector<16x64xf32>
    %cst_31 = arith.constant 1.000000e+00 : f32
    %88 = vector.broadcast %cst_31 : f32 to vector<16x64xf32>
    %89 = arith.addf %88, %87 : vector<16x64xf32>
    %90 = arith.divf %88, %89 : vector<16x64xf32>
    %91 = vector.extract_strided_slice %84 {offsets = [0, 64], sizes = [16, 32], strides = [1, 1]} : vector<16x96xf32> to vector<16x32xf32>
    %92 = math.tanh %91 : vector<16x32xf32>
    %93 = vector.extract_strided_slice %90 {offsets = [0, 0], sizes = [16, 32], strides = [1, 1]} : vector<16x64xf32> to vector<16x32xf32>
    %94 = vector.extract_strided_slice %90 {offsets = [0, 32], sizes = [16, 32], strides = [1, 1]} : vector<16x64xf32> to vector<16x32xf32>
    %95 = arith.mulf %93, %92 : vector<16x32xf32>
    %96 = math.tanh %95 : vector<16x32xf32>
    %97 = arith.mulf %94, %96 : vector<16x32xf32>
    %cst_32 = arith.constant 0.000000e+00 : f32
    %98 = vector.broadcast %cst_32 : f32 to vector<16x32xf32>
    %99 = arith.subf %98, %97 : vector<16x32xf32>
    %100 = math.exp %99 : vector<16x32xf32>
    %cst_33 = arith.constant 1.000000e+00 : f32
    %101 = vector.broadcast %cst_33 : f32 to vector<16x32xf32>
    %102 = arith.addf %101, %100 : vector<16x32xf32>
    %103 = math.sqrt %102 : vector<16x32xf32>
    %104 = arith.mulf %79, %103 : vector<16x32xf32>
    %c0_34 = arith.constant 0 : index
    %c0_35 = arith.constant 0 : index
    %105 = vector.load %arg9[%c0_34, %c0_35] : memref<16x32xf32, #tpu.memory_space<vmem>>, vector<16x32xf32>
    tpu.vector_store %arg9[%c0_34, %c0_35], %104 {strides = array<i32>} : memref<16x32xf32, #tpu.memory_space<vmem>>, vector<16x32xf32>,
    return
  }
  func.func @transform_0(%arg0: i32) -> (i32, i32) {
    %c0_i32 = arith.constant 0 : i32
    %c0_i32_0 = arith.constant 0 : i32
    %c0_i32_1 = arith.constant 0 : i32
    return %c0_i32, %c0_i32_0 : i32, i32
  }
  func.func @transform_1(%arg0: i32) -> (i32, i32) {
    %c0_i32 = arith.constant 0 : i32
    %c0_i32_0 = arith.constant 0 : i32
    return %arg0, %c0_i32 : i32, i32
  }
  func.func @transform_2(%arg0: i32) -> (i32, i32) {
    %c0_i32 = arith.constant 0 : i32
    %c0_i32_0 = arith.constant 0 : i32
    %c0_i32_1 = arith.constant 0 : i32
    return %c0_i32, %c0_i32_0 : i32, i32
  }
  func.func @transform_3(%arg0: i32) -> (i32, i32) {
    %c0_i32 = arith.constant 0 : i32
    %c0_i32_0 = arith.constant 0 : i32
    %c0_i32_1 = arith.constant 0 : i32
    return %c0_i32, %c0_i32_0 : i32, i32
  }
  func.func @transform_4(%arg0: i32) -> (i32, i32) {
    %c0_i32 = arith.constant 0 : i32
    %c0_i32_0 = arith.constant 0 : i32
    %c0_i32_1 = arith.constant 0 : i32
    return %c0_i32, %c0_i32_0 : i32, i32
  }
  func.func @transform_5(%arg0: i32) -> (i32, i32) {
    %c0_i32 = arith.constant 0 : i32
    %c0_i32_0 = arith.constant 0 : i32
    %c0_i32_1 = arith.constant 0 : i32
    return %c0_i32, %c0_i32_0 : i32, i32
  }
  func.func @transform_6(%arg0: i32) -> (i32, i32) {
    %c0_i32 = arith.constant 0 : i32
    %c0_i32_0 = arith.constant 0 : i32
    %c0_i32_1 = arith.constant 0 : i32
    return %c0_i32, %c0_i32_0 : i32, i32
  }
  func.func @transform_7(%arg0: i32) -> (i32, i32) {
    %c0_i32 = arith.constant 0 : i32
    %c0_i32_0 = arith.constant 0 : i32
    %c0_i32_1 = arith.constant 0 : i32
    return %c0_i32, %c0_i32_0 : i32, i32
  }
  func.func @transform_8(%arg0: i32) -> (i32, i32) {
    %c0_i32 = arith.constant 0 : i32
    %c0_i32_0 = arith.constant 0 : i32
    return %arg0, %c0_i32 : i32, i32
  }
}

</mosaic_0001>

<llo_original>
// kernel: tpu_custom_call.1
$region0: #{tpu_custom_call.1}
  #allocation0 [shape = 'u32[]', space=smem, size = 0x4, offset = 0x4, fixed_abs, tag = 'smem constant byte address 0x4 - core index']
  #allocation1 [shape = 'u32[144,128]{1,0:T(1,128)}', space=vmem, size = 0x12000, scoped, tag = 'internal scratch']
  #allocation2 [shape = 'f32[1,1]{1,0:T(1,128)S(6)}', space=smem, size = 0x200, scoped, tag = 'scoped memory for tpu_custom_call.1']
  %s0 = inlined_call_operand.<no memory space> [shape: f32[1,1], index: 0, kind: input, shape index: {}]
  %s1 = inlined_call_operand.vmem [shape: f32[32,4], index: 1, kind: input, shape index: {}]
  %s2 = inlined_call_operand.vmem [shape: bf16[12,32], index: 2, kind: input, shape index: {}]
  %s3 = inlined_call_operand.vmem [shape: f32[1,32], index: 3, kind: input, shape index: {}]
  %s4 = inlined_call_operand.hbm [shape: bf16[96,96], index: 4, kind: input, shape index: {}]
  %s5 = inlined_call_operand.vmem [shape: f32[1,96], index: 5, kind: input, shape index: {}]
  %s6 = inlined_call_operand.hbm [shape: bf16[96,96], index: 6, kind: input, shape index: {}]
  %s7 = inlined_call_operand.vmem [shape: f32[1,96], index: 7, kind: input, shape index: {}]
  %s8 = inlined_call_operand.hbm [shape: f32[32,32], index: 8, kind: output, shape index: {}]
  %s9 = sld [smem:[#allocation0]]
  $region73: #{tpu_custom_call.1} parent=0
    _
  %s11 = ssub.s32 1, %s9
  %s12 = scalar_select 0, %s11, %s9
  %13 = sst [smem:[#allocation2]] %s0
  $region1: #{tpu_custom_call.1} parent=0
    #allocation3 [shape = 'u8[24576]{0}', space=vmem, size = 0x6000, scoped, tag = 'input window, operand 4, single buffered']
    #allocation4 [shape = 's32[2]{0}', space=sflag, size = 0x8, scoped, tag = 'scoped memory for tpu_custom_call.1']
    #allocation5 [shape = 's32[2]{0}', space=sflag, size = 0x8, scoped, tag = 'scoped memory for tpu_custom_call.1']
    #allocation6 [shape = 'u8[24576]{0}', space=vmem, size = 0x6000, scoped, tag = 'input window, operand 6, single buffered']
    #allocation7 [shape = 's32[1]{0}', space=sflag, size = 0x4, scoped, tag = 'scoped memory for tpu_custom_call.1']
    #allocation8 [shape = 'u8[16384]{0}', space=vmem, size = 0x4000, scoped, tag = 'output window, operand 0']
    %14 = vsyncpa [#allocation4], 0
    %15 = vsyncpa [#allocation7], 0
    %16 = vsyncpa [#allocation5], 0
    %s17 = scalar_lea.sflag [#allocation5], 1
    %18 = vsyncpa %s17, 0
    loop: start=0, step=1, limit=4
    $region2: #{tpu_custom_call.1} parent=1 // loop_pre_header
      _
    $region3: #{tpu_custom_call.1} parent=1 // loop_header
      %s20 = sphi 0, %s24
      %p21 = scmp.ge.s32.totalorder %s20, 4
      %s28 = sphi 0, %s28
      %s30 = sphi 0, %s28
      %s31 = sphi 0, %s30
      %s45 = sphi 0, %s31
      %s51 = sphi 0, %s53
      %s54 = sphi 0, %s51
      %s55 = sphi 0, %s54
      %s71 = sphi 0, %s55
      %s75 = sphi 0, %s75
      %s77 = sphi 0, %s75
      %s78 = sphi 0, %s77
      %s92 = sphi 0, %s78
      %s96 = sphi 0, %s96
      %s98 = sphi 0, %s96
      %s99 = sphi 0, %s98
      %s113 = sphi 0, %s99
      %s117 = sphi 0, %s117
      %s119 = sphi 0, %s117
      %s120 = sphi 0, %s119
      %s134 = sphi 0, %s120
      %s138 = sphi 0, %s138
      %s140 = sphi 0, %s138
      %s141 = sphi 0, %s140
      %s155 = sphi 0, %s141
      %s159 = sphi 0, %s159
      %s161 = sphi 0, %s159
      %s162 = sphi 0, %s161
      %s176 = sphi 0, %s162
      %s180 = sphi 0, %s180
      %s182 = sphi 0, %s180
      %s183 = sphi 0, %s182
      %s197 = sphi 0, %s183
      %s203 = sphi 0, %s205
      %s206 = sphi 0, %s203
      %s207 = sphi 0, %s206
      %s223 = sphi 0, %s207
    $region4: #{tpu_custom_call.1} parent=1 // loop_header_branch
      %23 = sbr.rel (%p21) target = $region8
    $region5: #{tpu_custom_call.1} parent=1 // loop_body
      %s25 = ssub.s32 %s20, 1
      %s26 = ssub.s32 %s20, 2
      %s27 = sadd.s32 %s20, 1
      %s29 = sadd.s32 %s28, 1
      %p32 = scmp.eq.s32.totalorder %s20, 1
      %p33 = scmp.ne.s32.totalorder %s28, %s30
      %p34 = scmp.eq.s32.totalorder %s20, 0
      %p35 = por %p33, %p34
      %p36 = scmp.ne.s32.totalorder %s28, %s30
      %p37 = scmp.eq.s32.totalorder %s25, 1
      %p38 = por %p36, %p37
      %p39 = scmp.ne.s32.totalorder %s30, %s31
      %p40 = scmp.eq.s32.totalorder %s25, 0
      %p41 = por %p39, %p40
      %p42 = scmp.ne.s32.totalorder %s30, %s31
      %p43 = scmp.eq.s32.totalorder %s26, 1
      %p44 = por %p42, %p43
      %p46 = scmp.ne.s32.totalorder %s31, %s45
      %p47 = scmp.eq.s32.totalorder %s26, 0
      %p48 = por %p46, %p47
      %s49 = ssub.s32 %s20, %s27
      %p50 = scmp.eq.s32.totalorder %s49, 0
      %s52 = sadd.s32 %s51, 1
      %s53 = scalar_select %p50, %s51, %s52
      %p56 = pneg %p50
      %p57 = scmp.eq.s32.totalorder %s20, 1
      %p58 = por %p56, %p57
      %p59 = scmp.ne.s32.totalorder %s51, %s54
      %p60 = scmp.eq.s32.totalorder %s20, 0
      %p61 = por %p59, %p60
      %p62 = scmp.ne.s32.totalorder %s51, %s54
      %p63 = scmp.eq.s32.totalorder %s25, 1
      %p64 = por %p62, %p63
      %p65 = scmp.ne.s32.totalorder %s54, %s55
      %p66 = scmp.eq.s32.totalorder %s25, 0
      %p67 = por %p65, %p66
      %p68 = scmp.ne.s32.totalorder %s54, %s55
      %p69 = scmp.eq.s32.totalorder %s26, 1
      %p70 = por %p68, %p69
      %p72 = scmp.ne.s32.totalorder %s55, %s71
      %p73 = scmp.eq.s32.totalorder %s26, 0
      %p74 = por %p72, %p73
      %s76 = sadd.s32 %s75, 1
      %p79 = scmp.eq.s32.totalorder %s20, 1
      %p80 = scmp.ne.s32.totalorder %s75, %s77
      %p81 = scmp.eq.s32.totalorder %s20, 0
      %p82 = por %p80, %p81
      %p83 = scmp.ne.s32.totalorder %s75, %s77
      %p84 = scmp.eq.s32.totalorder %s25, 1
      %p85 = por %p83, %p84
      %p86 = scmp.ne.s32.totalorder %s77, %s78
      %p87 = scmp.eq.s32.totalorder %s25, 0
      %p88 = por %p86, %p87
      %p89 = scmp.ne.s32.totalorder %s77, %s78
      %p90 = scmp.eq.s32.totalorder %s26, 1
      %p91 = por %p89, %p90
      %p93 = scmp.ne.s32.totalorder %s78, %s92
      %p94 = scmp.eq.s32.totalorder %s26, 0
      %p95 = por %p93, %p94
      %s97 = sadd.s32 %s96, 1
      %p100 = scmp.eq.s32.totalorder %s20, 1
      %p101 = scmp.ne.s32.totalorder %s96, %s98
      %p102 = scmp.eq.s32.totalorder %s20, 0
      %p103 = por %p101, %p102
      %p104 = scmp.ne.s32.totalorder %s96, %s98
      %p105 = scmp.eq.s32.totalorder %s25, 1
      %p106 = por %p104, %p105
      %p107 = scmp.ne.s32.totalorder %s98, %s99
      %p108 = scmp.eq.s32.totalorder %s25, 0
      %p109 = por %p107, %p108
      %p110 = scmp.ne.s32.totalorder %s98, %s99
      %p111 = scmp.eq.s32.totalorder %s26, 1
      %p112 = por %p110, %p111
      %p114 = scmp.ne.s32.totalorder %s99, %s113
      %p115 = scmp.eq.s32.totalorder %s26, 0
      %p116 = por %p114, %p115
      %s118 = sadd.s32 %s117, 1
      %p121 = scmp.eq.s32.totalorder %s20, 1
      %p122 = scmp.ne.s32.totalorder %s117, %s119
      %p123 = scmp.eq.s32.totalorder %s20, 0
      %p124 = por %p122, %p123
      %p125 = scmp.ne.s32.totalorder %s117, %s119
      %p126 = scmp.eq.s32.totalorder %s25, 1
      %p127 = por %p125, %p126
      %p128 = scmp.ne.s32.totalorder %s119, %s120
      %p129 = scmp.eq.s32.totalorder %s25, 0
      %p130 = por %p128, %p129
      %p131 = scmp.ne.s32.totalorder %s119, %s120
      %p132 = scmp.eq.s32.totalorder %s26, 1
      %p133 = por %p131, %p132
      %p135 = scmp.ne.s32.totalorder %s120, %s134
      %p136 = scmp.eq.s32.totalorder %s26, 0
      %p137 = por %p135, %p136
      %s139 = sadd.s32 %s138, 1
      %p142 = scmp.eq.s32.totalorder %s20, 1
      %p143 = scmp.ne.s32.totalorder %s138, %s140
      %p144 = scmp.eq.s32.totalorder %s20, 0
      %p145 = por %p143, %p144
      %p146 = scmp.ne.s32.totalorder %s138, %s140
      %p147 = scmp.eq.s32.totalorder %s25, 1
      %p148 = por %p146, %p147
      %p149 = scmp.ne.s32.totalorder %s140, %s141
      %p150 = scmp.eq.s32.totalorder %s25, 0
      %p151 = por %p149, %p150
      %p152 = scmp.ne.s32.totalorder %s140, %s141
      %p153 = scmp.eq.s32.totalorder %s26, 1
      %p154 = por %p152, %p153
      %p156 = scmp.ne.s32.totalorder %s141, %s155
      %p157 = scmp.eq.s32.totalorder %s26, 0
      %p158 = por %p156, %p157
      %s160 = sadd.s32 %s159, 1
      %p163 = scmp.eq.s32.totalorder %s20, 1
      %p164 = scmp.ne.s32.totalorder %s159, %s161
      %p165 = scmp.eq.s32.totalorder %s20, 0
      %p166 = por %p164, %p165
      %p167 = scmp.ne.s32.totalorder %s159, %s161
      %p168 = scmp.eq.s32.totalorder %s25, 1
      %p169 = por %p167, %p168
      %p170 = scmp.ne.s32.totalorder %s161, %s162
      %p171 = scmp.eq.s32.totalorder %s25, 0
      %p172 = por %p170, %p171
      %p173 = scmp.ne.s32.totalorder %s161, %s162
      %p174 = scmp.eq.s32.totalorder %s26, 1
      %p175 = por %p173, %p174
      %p177 = scmp.ne.s32.totalorder %s162, %s176
      %p178 = scmp.eq.s32.totalorder %s26, 0
      %p179 = por %p177, %p178
      %s181 = sadd.s32 %s180, 1
      %p184 = scmp.eq.s32.totalorder %s20, 1
      %p185 = scmp.ne.s32.totalorder %s180, %s182
      %p186 = scmp.eq.s32.totalorder %s20, 0
      %p187 = por %p185, %p186
      %p188 = scmp.ne.s32.totalorder %s180, %s182
      %p189 = scmp.eq.s32.totalorder %s25, 1
      %p190 = por %p188, %p189
      %p191 = scmp.ne.s32.totalorder %s182, %s183
      %p192 = scmp.eq.s32.totalorder %s25, 0
      %p193 = por %p191, %p192
      %p194 = scmp.ne.s32.totalorder %s182, %s183
      %p195 = scmp.eq.s32.totalorder %s26, 1
      %p196 = por %p194, %p195
      %p198 = scmp.ne.s32.totalorder %s183, %s197
      %p199 = scmp.eq.s32.totalorder %s26, 0
      %p200 = por %p198, %p199
      %s201 = ssub.s32 %s20, %s27
      %p202 = scmp.eq.s32.totalorder %s201, 0
      %s204 = sadd.s32 %s203, 1
      %s205 = scalar_select %p202, %s203, %s204
      %p208 = pneg %p202
      %p209 = scmp.eq.s32.totalorder %s20, 1
      %p210 = por %p208, %p209
      %p211 = scmp.ne.s32.totalorder %s203, %s206
      %p212 = scmp.eq.s32.totalorder %s20, 0
      %p213 = por %p211, %p212
      %p214 = scmp.ne.s32.totalorder %s203, %s206
      %p215 = scmp.eq.s32.totalorder %s25, 1
      %p216 = por %p214, %p215
      %p217 = scmp.ne.s32.totalorder %s206, %s207
      %p218 = scmp.eq.s32.totalorder %s25, 0
      %p219 = por %p217, %p218
      %p220 = scmp.ne.s32.totalorder %s206, %s207
      %p221 = scmp.eq.s32.totalorder %s26, 1
      %p222 = por %p220, %p221
      %p224 = scmp.ne.s32.totalorder %s207, %s223
      %p225 = scmp.eq.s32.totalorder %s26, 0
      %p226 = por %p224, %p225
      %p227 = scmp.le.s32.totalorder 1, %s20
      %p228 = scmp.lt.s32.totalorder %s20, 3
      %p229 = pnand %p227, %p228
      %p230 = pneg %p229
      // Predicated region
      $region9: #{tpu_custom_call.1} parent=5 // pred_check
        _
      $region10: #{tpu_custom_call.1} parent=5 // pred_check_branch
        %232 = sbr.rel (%p229) target = $region12
      $region11: #{tpu_custom_call.1} parent=5 // pred_region
        %s233 = ssub.s32 %s20, 1
        // Predicated region
        $region13: #{tpu_custom_call.1} parent=11 // pred_check
          %p234 = pneg %p41
        $region14: #{tpu_custom_call.1} parent=11 // pred_check_branch
          %236 = sbr.rel (%p234) target = $region16
        $region15: #{tpu_custom_call.1} parent=11 // pred_region
          _
        $region16: #{tpu_custom_call.1} parent=11 // pred_fallthru
          _
        // Predicated region
        $region17: #{tpu_custom_call.1} parent=11 // pred_check
          %p237 = pneg %p88
        $region18: #{tpu_custom_call.1} parent=11 // pred_check_branch
          %239 = sbr.rel (%p237) target = $region20
        $region19: #{tpu_custom_call.1} parent=11 // pred_region
          _
        $region20: #{tpu_custom_call.1} parent=11 // pred_fallthru
          _
        // Predicated region
        $region21: #{tpu_custom_call.1} parent=11 // pred_check
          %p240 = pneg %p109
        $region22: #{tpu_custom_call.1} parent=11 // pred_check_branch
          %242 = sbr.rel (%p240) target = $region24
        $region23: #{tpu_custom_call.1} parent=11 // pred_region
          _
        $region24: #{tpu_custom_call.1} parent=11 // pred_fallthru
          _
        // Predicated region
        $region25: #{tpu_custom_call.1} parent=11 // pred_check
          %p243 = pneg %p130
        $region26: #{tpu_custom_call.1} parent=11 // pred_check_branch
          %245 = sbr.rel (%p243) target = $region28
        $region27: #{tpu_custom_call.1} parent=11 // pred_region
          %s247 = ssub.s32 768, 768
          %248 = vsyncadd [#allocation4], %s247
          %s249 = sshll.u32 [#allocation3], 4
          %s250 = int_to_ptr.vmem [resolvable:$true] %s249
          %255 = dma.hbm_to_vmem [thread:$0]  %s4, 768, %s250, [#allocation4], 64, 64, 4
        $region28: #{tpu_custom_call.1} parent=11 // pred_fallthru
          _
        // Predicated region
        $region29: #{tpu_custom_call.1} parent=11 // pred_check
          %p256 = pneg %p151
        $region30: #{tpu_custom_call.1} parent=11 // pred_check_branch
          %258 = sbr.rel (%p256) target = $region32
        $region31: #{tpu_custom_call.1} parent=11 // pred_region
          _
        $region32: #{tpu_custom_call.1} parent=11 // pred_fallthru
          _
        // Predicated region
        $region33: #{tpu_custom_call.1} parent=11 // pred_check
          %p259 = pneg %p172
        $region34: #{tpu_custom_call.1} parent=11 // pred_check_branch
          %261 = sbr.rel (%p259) target = $region36
        $region35: #{tpu_custom_call.1} parent=11 // pred_region
          %s263 = ssub.s32 768, 768
          %264 = vsyncadd [#allocation7], %s263
          %s265 = sshll.u32 [#allocation6], 4
          %s266 = int_to_ptr.vmem [resolvable:$true] %s265
          %271 = dma.hbm_to_vmem [thread:$0]  %s6, 768, %s266, [#allocation7], 64, 64, 4
        $region36: #{tpu_custom_call.1} parent=11 // pred_fallthru
          _
        // Predicated region
        $region37: #{tpu_custom_call.1} parent=11 // pred_check
          %p272 = pneg %p193
        $region38: #{tpu_custom_call.1} parent=11 // pred_check_branch
          %274 = sbr.rel (%p272) target = $region40
        $region39: #{tpu_custom_call.1} parent=11 // pred_region
          _
        $region40: #{tpu_custom_call.1} parent=11 // pred_fallthru
          _
      $region12: #{tpu_custom_call.1} parent=5 // pred_fallthru
        _
      %p275 = scmp.lt.s32.totalorder %s20, 2
      // Predicated region
      $region41: #{tpu_custom_call.1} parent=5 // pred_check
        %p276 = pneg %p275
      $region42: #{tpu_custom_call.1} parent=5 // pred_check_branch
        %278 = sbr.rel (%p276) target = $region44
      $region43: #{tpu_custom_call.1} parent=5 // pred_region
        // Predicated region
        $region45: #{tpu_custom_call.1} parent=43 // pred_check
          %p279 = pneg %p61
        $region46: #{tpu_custom_call.1} parent=43 // pred_check_branch
          %281 = sbr.rel (%p279) target = $region48
        $region47: #{tpu_custom_call.1} parent=43 // pred_region
          %s282 = smul.u32 2, %s20
          %p283 = scmp.lt.s32.totalorder %s282, 3
          %s284 = scalar_select %p283, %s282, 3
          %s285 = smul.addr %s284, 8
          %s286 = scalar_lea.vmem %s1, %s285
          %s287 = smul.u32 2, %s20
        $region48: #{tpu_custom_call.1} parent=43 // pred_fallthru
          _
      $region44: #{tpu_custom_call.1} parent=5 // pred_fallthru
        _
      %p288 = scmp.le.s32.totalorder 1, %s20
      %p289 = scmp.lt.s32.totalorder %s20, 3
      %p290 = pnand %p288, %p289
      %p291 = pneg %p290
      // Predicated region
      $region49: #{tpu_custom_call.1} parent=5 // pred_check
        _
      $region50: #{tpu_custom_call.1} parent=5 // pred_check_branch
        %293 = sbr.rel (%p290) target = $region52
      $region51: #{tpu_custom_call.1} parent=5 // pred_region
        %s294 = ssub.s32 %s20, 1
        // Predicated region
        $region53: #{tpu_custom_call.1} parent=51 // pred_check
          %p295 = pneg %p130
        $region54: #{tpu_custom_call.1} parent=51 // pred_check_branch
          %297 = sbr.rel (%p295) target = $region56
        $region55: #{tpu_custom_call.1} parent=51 // pred_region
          %298 = dma.done [#allocation4], 768
        $region56: #{tpu_custom_call.1} parent=51 // pred_fallthru
          _
        // Predicated region
        $region57: #{tpu_custom_call.1} parent=51 // pred_check
          %p299 = pneg %p172
        $region58: #{tpu_custom_call.1} parent=51 // pred_check_branch
          %301 = sbr.rel (%p299) target = $region60
        $region59: #{tpu_custom_call.1} parent=51 // pred_region
          %302 = dma.done [#allocation7], 768
        $region60: #{tpu_custom_call.1} parent=51 // pred_fallthru
          _
        %p303 = pneg %p41
        %p304 = pneg %p38
        %s305 = smul.u32 2, %s25
        %p306 = scmp.lt.s32.totalorder %s305, 3
        %s307 = scalar_select %p306, %s305, 3
        %s308 = smul.addr %s307, 8
        %s309 = scalar_lea.vmem %s1, %s308
        %p310 = pneg %p67
        %p311 = pneg %p64
        %p312 = pneg %p88
        %p313 = pneg %p85
        %p314 = pneg %p109
        %p315 = pneg %p106
        %p316 = pneg %p130
        %p317 = pneg %p127
        %p318 = pneg %p151
        %p319 = pneg %p148
        %p320 = pneg %p172
        %p321 = pneg %p169
        %p322 = pneg %p193
        %p323 = pneg %p190
        %p324 = pneg %p219
        %p325 = pneg %p216
        %s326 = sand.u32 %s206, 1
        %s327 = scalar_lea.sflag [#allocation5], %s326
        %s328 = sand.u32 %s206, 1
        %s329 = smul.addr %s328, 16
        %s330 = scalar_lea.vmem [#allocation8], %s329
        %s331 = smul.u32 2, %s25
        %p332 = scmp.lt.s32.totalorder %s331, 3
        %s333 = scalar_select %p332, %s331, 3
        %s334 = smul.addr %s333, 8
        %s335 = scalar_lea.vmem %s1, %s334
        %s336 = smul.u32 2, %s25
        %s337 = smul.u32 2, %s25
        %s339 = sld [smem:[#allocation2]]
        %v340 = vld [vmem:[%s335] sm:$0xff]
        %v341 = vld [vmem:[%s335 + $0x8] sm:$0xff]
        %v342 = vstv %s339
        %v343 = vmul.f32 %v340, %v342
        %v344 = vmul.f32 %v341, %v342
        %v345 = vlaneseq
        %v346 = vshrl.u32 %v345, 7
        %v347 = vadd.s32 %v346, 8
        %vm348 = vcmp.lt.s32.totalorder %v346, 0
        %v349 = vsub.s32 0, %v346
        %v350 = vsel %vm348, %v349, %v346
        %v351 = vshrl.u32 %v350, 4
        %v352 = vand.u32 %v350, 15
        %v353 = vsub.s32 0, %v352
        %v354 = vsel %vm348, %v353, %v352
        %vm355 = vcmp.lt.s32.totalorder %v347, 0
        %v356 = vsub.s32 0, %v347
        %v357 = vsel %vm355, %v356, %v347
        %v358 = vshrl.u32 %v357, 4
        %v359 = vand.u32 %v357, 15
        %v360 = vsub.s32 0, %v359
        %v361 = vsel %vm355, %v360, %v359
        %vm362 = vcmp.ne.s32.totalorder %v354, 0
        %vm363 = vcmp.ne.s32.totalorder %v361, 0
        %vm364 = vcmp.lt.s32.totalorder %v354, 0
        %vm365 = vcmp.lt.s32.totalorder %v361, 0
        %vm366 = vmand %vm364, %vm362
        %vm367 = vmand %vm365, %vm363
        %v368 = vadd.s32 %v354, 16
        %v369 = vadd.s32 %v361, 16
        %v370 = vsel %vm366, %v368, %v354
        %v371 = vsel %vm367, %v369, %v361
        %vm372 = vcmp.ge.s32.totalorder %v370, 1
        %vm373 = vcmp.ge.s32.totalorder %v371, 1
        %vm374 = vcmp.lt.s32.totalorder %v370, 16
        %vm375 = vcmp.lt.s32.totalorder %v371, 16
        %vm376 = vmand %vm372, %vm374
        %vm377 = vmand %vm373, %vm375
        %vm378 = vcmp.lt.s32.totalorder %v370, 15
        %vm379 = vcmp.lt.s32.totalorder %v371, 15
        %v380 = vrot.slane %v343, 7
        %v381 = vrot.slane %v344, 7
        %vm382 = vcmp.lt.s32.totalorder %v346, 1
        %v383 = vsel %vm382, %v380, %v381
        %v384 = vsel %vm382, %v381, %v380
        %v385 = vsel %vm376, 1, 0
        %v386 = vsel %vm377, 1, 0
        %vm387 = vcmp.eq.s32.totalorder %v385, 1
        %vm388 = vcmp.eq.s32.totalorder %v386, 1
        %v389 = vsel %vm387, %v384, 0.0
        %v390 = vsel %vm388, %v383, 0.0
        %v391 = vrot.slane %v343, 1
        %v392 = vrot.slane %v344, 1
        %vm393 = vcmp.lt.s32.totalorder %v346, 7
        %v394 = vsel %vm393, %v391, %v392
        %v395 = vsel %vm393, %v392, %v391
        %v396 = vsel %vm378, 1, 0
        %v397 = vsel %vm379, 1, 0
        %vm398 = vcmp.eq.s32.totalorder %v396, 1
        %vm399 = vcmp.eq.s32.totalorder %v397, 1
        %v400 = vsel %vm398, %v394, 0.0
        %v401 = vsel %vm399, %v395, 0.0
        %v402 = vpack.c.bf16 %v390, %v389
        %v403 = vpack.c.bf16 %v344, %v343
        %v404 = vpack.c.bf16 %v401, %v400
        %406 = vrot.lane.b32.xlu0 %v403, 4
        %v407 = vpop.permute.xlu0 %406
        %409 = vrot.lane.b32.xlu0 %v404, 8
        %v410 = vpop.permute.xlu0 %409
        %vm411 = vcmask 31744
        %v414 = vsel %vm411, %v402, %v407
        %vm415 = vcmask 64512
        %v417 = vsel %vm415, %v414, %v410
        %v418 = vld [vmem:[%s2] sm:$0xf]
        %v419 = vld [vmem:[%s2 + $0x4] sm:$0x3]
        %v420 = vld [vmem:[%s3] sm:$0x1]
        %v422 = vlaneseq
        %v423 = vshrl.u32 %v422, 7
        %v424 = vsub.s32 0, %v423
        %v425 = vrot.slane %v420, %v424
        %v429 = vunpack.c.l.b16 %v418
        %v430 = vunpack.c.l.b16 %v419
        %v431 = vpack.c.b16 %v430, %v429
        %vm432 = vcmask 97280
        %v433 = vsel %vm432, %v417, 0
        %vm435 = vcmask 1045504
        %v437 = vsel %vm435, %v431, 0
        %439 = vmatprep.subr.bf16.mxu0 0
        %440 = vmatpush1.bf16.msra.mxu0 0
        %441 = vmatprep.subr.bf16.mxu0 0
        %442 = vmatpush1.bf16.msra.mxu0 0
        %443 = vmatprep.subr.bf16.mxu0 0
        %444 = vmatpush1.bf16.msra.mxu0 0
        %445 = vmatprep.subr.bf16.mxu0 0
        %446 = vmatpush1.bf16.msra.mxu0 0
        %447 = vmatprep.subr.bf16.mxu0 0
        %448 = vmatpush1.bf16.msra.mxu0 0
        %449 = vmatprep.subr.bf16.mxu0 0
        %450 = vmatpush1.bf16.msra.mxu0 0
        %451 = vmatprep.subr.bf16.mxu0 0
        %452 = vmatpush1.bf16.msra.mxu0 0
        %453 = vmatprep.subr.bf16.mxu0 0
        %454 = vmatpush1.bf16.msra.mxu0 %v437
        %455 = vmatprep.subr.bf16.mxu0 0
        %456 = vmatpush2.bf16.msra.mxu0 0
        %457 = vmatprep.subr.bf16.mxu0 0
        %458 = vmatpush2.bf16.msra.mxu0 0
        %459 = vmatprep.subr.bf16.mxu0 0
        %460 = vmatpush2.bf16.msra.mxu0 0
        %461 = vmatprep.subr.bf16.mxu0 0
        %462 = vmatpush2.bf16.msra.mxu0 0
        %463 = vmatprep.subr.bf16.mxu0 0
        %464 = vmatpush2.bf16.msra.mxu0 0
        %465 = vmatprep.subr.bf16.mxu0 0
        %466 = vmatpush2.bf16.msra.mxu0 0
        %467 = vmatprep.subr.bf16.mxu0 0
        %468 = vmatpush2.bf16.msra.mxu0 0
        %469 = vmatprep.subr.bf16.mxu0 0
        %470 = vmatpush2.bf16.msra.mxu0 0
        %471 = vmatprep.mubr.bf16.mxu0 0
        %472 = vmatmul.mubr.bf16.gmra.mxu0 %v433
        %v473 = vpop.f32.mrf.mxu0
        %v474 = vadd.f32 %v425, %v473
        %v475 = vpop.f32.mrf.mxu0
        %v476 = vpop.f32.mrf.mxu0
        %v477 = vadd.f32 %v425, %v476
        %v478 = vpop.f32.mrf.mxu0
        %479 = vdwg.mxu0
        %v480 = vrot.slane %v474, 7
        %v481 = vrot.slane %v477, 7
        %v482 = vsel %vm382, %v480, %v481
        %v483 = vsel %vm382, %v481, %v480
        %v484 = vsel %vm387, %v483, 0.0
        %v485 = vsel %vm388, %v482, 0.0
        %v486 = vrot.slane %v474, 1
        %v487 = vrot.slane %v477, 1
        %v488 = vsel %vm393, %v486, %v487
        %v489 = vsel %vm393, %v487, %v486
        %v490 = vsel %vm398, %v488, 0.0
        %v491 = vsel %vm399, %v489, 0.0
        %v492 = vpack.c.bf16 %v485, %v484
        %v493 = vpack.c.bf16 %v477, %v474
        %v494 = vpack.c.bf16 %v491, %v490
        %496 = vrot.lane.b32.xlu0 %v493, 32
        %v497 = vpop.permute.xlu0 %496
        %499 = vrot.lane.b32.xlu0 %v494, 64
        %v500 = vpop.permute.xlu0 %499
        %vm501 = vcmask 261120
        %v504 = vsel %vm501, %v492, %v497
        %vm505 = vcmask 523264
        %v507 = vsel %vm505, %v504, %v500
        %v509 = vmul.bf16 %v507, %v507
        %v510 = vld [vmem:[#allocation3] sm:$0xf]
        %v511 = vld [vmem:[#allocation3 + $0x4] sm:$0xf]
        %v512 = vld [vmem:[#allocation3 + $0x8] sm:$0xf]
        %v513 = vld [vmem:[#allocation3 + $0xc] sm:$0xf]
        %v514 = vld [vmem:[#allocation3 + $0x10] sm:$0xf]
        %v515 = vld [vmem:[#allocation3 + $0x14] sm:$0xf]
        %v516 = vld [vmem:[#allocation3 + $0x18] sm:$0xf]
        %v517 = vld [vmem:[#allocation3 + $0x1c] sm:$0xf]
        %v518 = vld [vmem:[#allocation3 + $0x20] sm:$0xf]
        %v519 = vld [vmem:[#allocation3 + $0x24] sm:$0xf]
        %v520 = vld [vmem:[#allocation3 + $0x28] sm:$0xf]
        %v521 = vld [vmem:[#allocation3 + $0x2c] sm:$0xf]
        %v522 = vld [vmem:[%s5] sm:$0x1]
        %v524 = vlaneseq
        %v525 = vshrl.u32 %v524, 7
        %v526 = vsub.s32 0, %v525
        %v527 = vrot.slane %v522, %v526
        %v541 = vunpack.c.l.b16 %v510
        %v542 = vunpack.c.l.b16 %v511
        %v543 = vunpack.c.l.b16 %v512
        %v544 = vunpack.c.l.b16 %v513
        %v545 = vunpack.c.l.b16 %v514
        %v546 = vunpack.c.l.b16 %v515
        %v547 = vunpack.c.l.b16 %v516
        %v548 = vunpack.c.l.b16 %v517
        %v549 = vunpack.c.l.b16 %v518
        %v550 = vunpack.c.l.b16 %v519
        %v551 = vunpack.c.l.b16 %v520
        %v552 = vunpack.c.l.b16 %v521
        %v553 = vpack.c.b16 %v542, %v541
        %v554 = vpack.c.b16 %v544, %v543
        %v555 = vpack.c.b16 %v546, %v545
        %v556 = vpack.c.b16 %v548, %v547
        %v557 = vpack.c.b16 %v550, %v549
        %v558 = vpack.c.b16 %v552, %v551
        %vm565 = vcmask 785408
        %v566 = vsel %vm565, %v507, 0
        %568 = vmatprep.subr.bf16.mxu0 0
        %569 = vmatpush1.bf16.msra.mxu0 0
        %570 = vmatprep.subr.bf16.mxu0 0
        %571 = vmatpush1.bf16.msra.mxu0 0
        %572 = vmatprep.subr.bf16.mxu0 0
        %573 = vmatpush1.bf16.msra.mxu0 %v558
        %574 = vmatprep.subr.bf16.mxu0 0
        %575 = vmatpush1.bf16.msra.mxu0 %v557
        %576 = vmatprep.subr.bf16.mxu0 0
        %577 = vmatpush1.bf16.msra.mxu0 %v556
        %578 = vmatprep.subr.bf16.mxu0 0
        %579 = vmatpush1.bf16.msra.mxu0 %v555
        %580 = vmatprep.subr.bf16.mxu0 0
        %581 = vmatpush1.bf16.msra.mxu0 %v554
        %582 = vmatprep.subr.bf16.mxu0 0
        %583 = vmatpush1.bf16.msra.mxu0 %v553
        %584 = vmatprep.subr.bf16.mxu0 0
        %585 = vmatpush2.bf16.msra.mxu0 0
        %586 = vmatprep.subr.bf16.mxu0 0
        %587 = vmatpush2.bf16.msra.mxu0 0
        %588 = vmatprep.subr.bf16.mxu0 0
        %589 = vmatpush2.bf16.msra.mxu0 0
        %590 = vmatprep.subr.bf16.mxu0 0
        %591 = vmatpush2.bf16.msra.mxu0 0
        %592 = vmatprep.subr.bf16.mxu0 0
        %593 = vmatpush2.bf16.msra.mxu0 0
        %594 = vmatprep.subr.bf16.mxu0 0
        %595 = vmatpush2.bf16.msra.mxu0 0
        %596 = vmatprep.subr.bf16.mxu0 0
        %597 = vmatpush2.bf16.msra.mxu0 0
        %598 = vmatprep.subr.bf16.mxu0 0
        %599 = vmatpush2.bf16.msra.mxu0 0
        %600 = vmatprep.mubr.bf16.mxu0 0
        %601 = vmatmul.mubr.bf16.gmra.mxu0 %v566
        %v602 = vpop.f32.mrf.mxu0
        %v603 = vadd.f32 %v527, %v602
        %v604 = vpop.f32.mrf.mxu0
        %v605 = vpop.f32.mrf.mxu0
        %v606 = vadd.f32 %v527, %v605
        %v607 = vpop.f32.mrf.mxu0
        %608 = vdwg.mxu0
        %v609 = vxor.u32 %v603, 2147483648
        %v610 = vxor.u32 %v606, 2147483648
        %v611 = vmul.f32 %v609, 1.442695
        %v612 = vpow.pop %v611
        %v613 = vmul.f32 %v610, 1.442695
        %v614 = vpow.pop %v613
        %v615 = vadd.f32 %v612, 1.0
        %v616 = vadd.f32 %v614, 1.0
        %v617 = vrcp.pop %v615
        %v618 = vmul.f32 1.0, %v617
        %v619 = vrcp.pop %v616
        %v620 = vmul.f32 1.0, %v619
        %v621 = vtanh.pop %v603
        %v622 = vtanh.pop %v606
        %625 = vrot.lane.b32.xlu0 %v621, 64
        %v626 = vpop.permute.xlu0 %625
        %627 = vrot.lane.b32.xlu0 %v622, 64
        %v628 = vpop.permute.xlu0 %627
        %v631 = vmul.f32 %v618, %v626
        %v632 = vmul.f32 %v620, %v628
        %v633 = vtanh.pop %v631
        %v634 = vtanh.pop %v632
        %637 = vrot.lane.b32.xlu0 %v633, 32
        %v638 = vpop.permute.xlu0 %637
        %639 = vrot.lane.b32.xlu0 %v634, 32
        %v640 = vpop.permute.xlu0 %639
        %v643 = vmul.f32 %v618, %v638
        %v644 = vmul.f32 %v620, %v640
        %v645 = vld [vmem:[#allocation6] sm:$0xf]
        %v646 = vld [vmem:[#allocation6 + $0x4] sm:$0xf]
        %v647 = vld [vmem:[#allocation6 + $0x8] sm:$0xf]
        %v648 = vld [vmem:[#allocation6 + $0xc] sm:$0xf]
        %v649 = vld [vmem:[#allocation6 + $0x10] sm:$0xf]
        %v650 = vld [vmem:[#allocation6 + $0x14] sm:$0xf]
        %v651 = vld [vmem:[#allocation6 + $0x18] sm:$0xf]
        %v652 = vld [vmem:[#allocation6 + $0x1c] sm:$0xf]
        %v653 = vld [vmem:[#allocation6 + $0x20] sm:$0xf]
        %v654 = vld [vmem:[#allocation6 + $0x24] sm:$0xf]
        %v655 = vld [vmem:[#allocation6 + $0x28] sm:$0xf]
        %v656 = vld [vmem:[#allocation6 + $0x2c] sm:$0xf]
        %v657 = vld [vmem:[%s7] sm:$0x1]
        %v659 = vlaneseq
        %v660 = vshrl.u32 %v659, 7
        %v661 = vsub.s32 0, %v660
        %v662 = vrot.slane %v657, %v661
        %v676 = vunpack.c.l.b16 %v645
        %v677 = vunpack.c.l.b16 %v646
        %v678 = vunpack.c.l.b16 %v647
        %v679 = vunpack.c.l.b16 %v648
        %v680 = vunpack.c.l.b16 %v649
        %v681 = vunpack.c.l.b16 %v650
        %v682 = vunpack.c.l.b16 %v651
        %v683 = vunpack.c.l.b16 %v652
        %v684 = vunpack.c.l.b16 %v653
        %v685 = vunpack.c.l.b16 %v654
        %v686 = vunpack.c.l.b16 %v655
        %v687 = vunpack.c.l.b16 %v656
        %v688 = vpack.c.b16 %v677, %v676
        %v689 = vpack.c.b16 %v679, %v678
        %v690 = vpack.c.b16 %v681, %v680
        %v691 = vpack.c.b16 %v683, %v682
        %v692 = vpack.c.b16 %v685, %v684
        %v693 = vpack.c.b16 %v687, %v686
        %v701 = vsel %vm565, %v509, 0
        %703 = vmatprep.subr.bf16.mxu0 0
        %704 = vmatpush1.bf16.msra.mxu0 0
        %705 = vmatprep.subr.bf16.mxu0 0
        %706 = vmatpush1.bf16.msra.mxu0 0
        %707 = vmatprep.subr.bf16.mxu0 0
        %708 = vmatpush1.bf16.msra.mxu0 %v693
        %709 = vmatprep.subr.bf16.mxu0 0
        %710 = vmatpush1.bf16.msra.mxu0 %v692
        %711 = vmatprep.subr.bf16.mxu0 0
        %712 = vmatpush1.bf16.msra.mxu0 %v691
        %713 = vmatprep.subr.bf16.mxu0 0
        %714 = vmatpush1.bf16.msra.mxu0 %v690
        %715 = vmatprep.subr.bf16.mxu0 0
        %716 = vmatpush1.bf16.msra.mxu0 %v689
        %717 = vmatprep.subr.bf16.mxu0 0
        %718 = vmatpush1.bf16.msra.mxu0 %v688
        %719 = vmatprep.subr.bf16.mxu0 0
        %720 = vmatpush2.bf16.msra.mxu0 0
        %721 = vmatprep.subr.bf16.mxu0 0
        %722 = vmatpush2.bf16.msra.mxu0 0
        %723 = vmatprep.subr.bf16.mxu0 0
        %724 = vmatpush2.bf16.msra.mxu0 0
        %725 = vmatprep.subr.bf16.mxu0 0
        %726 = vmatpush2.bf16.msra.mxu0 0
        %727 = vmatprep.subr.bf16.mxu0 0
        %728 = vmatpush2.bf16.msra.mxu0 0
        %729 = vmatprep.subr.bf16.mxu0 0
        %730 = vmatpush2.bf16.msra.mxu0 0
        %731 = vmatprep.subr.bf16.mxu0 0
        %732 = vmatpush2.bf16.msra.mxu0 0
        %733 = vmatprep.subr.bf16.mxu0 0
        %734 = vmatpush2.bf16.msra.mxu0 0
        %735 = vmatprep.mubr.bf16.mxu0 0
        %736 = vmatmul.mubr.bf16.gmra.mxu0 %v701
        %v737 = vpop.f32.mrf.mxu0
        %v738 = vadd.f32 %v662, %v737
        %v739 = vpop.f32.mrf.mxu0
        %v740 = vpop.f32.mrf.mxu0
        %v741 = vadd.f32 %v662, %v740
        %v742 = vpop.f32.mrf.mxu0
        %743 = vdwg.mxu0
        %v744 = vxor.u32 %v738, 2147483648
        %v745 = vxor.u32 %v741, 2147483648
        %v746 = vmul.f32 %v744, 1.442695
        %v747 = vpow.pop %v746
        %v748 = vmul.f32 %v745, 1.442695
        %v749 = vpow.pop %v748
        %v750 = vadd.f32 %v747, 1.0
        %v751 = vadd.f32 %v749, 1.0
        %v752 = vrcp.pop %v750
        %v753 = vmul.f32 1.0, %v752
        %v754 = vrcp.pop %v751
        %v755 = vmul.f32 1.0, %v754
        %v756 = vtanh.pop %v738
        %v757 = vtanh.pop %v741
        %760 = vrot.lane.b32.xlu0 %v756, 64
        %v761 = vpop.permute.xlu0 %760
        %762 = vrot.lane.b32.xlu0 %v757, 64
        %v763 = vpop.permute.xlu0 %762
        %v766 = vmul.f32 %v753, %v761
        %v767 = vmul.f32 %v755, %v763
        %v768 = vtanh.pop %v766
        %v769 = vtanh.pop %v767
        %772 = vrot.lane.b32.xlu0 %v768, 32
        %v773 = vpop.permute.xlu0 %772
        %774 = vrot.lane.b32.xlu0 %v769, 32
        %v775 = vpop.permute.xlu0 %774
        %v778 = vmul.f32 %v753, %v773
        %v779 = vmul.f32 %v755, %v775
        %v780 = vsub.f32 0.0, %v778
        %v781 = vsub.f32 0.0, %v779
        %v782 = vmul.f32 %v780, 1.442695
        %v783 = vpow.pop %v782
        %v784 = vmul.f32 %v781, 1.442695
        %v785 = vpow.pop %v784
        %v786 = vadd.f32 %v783, 1.0
        %v787 = vadd.f32 %v785, 1.0
        %v788 = vrsqrt.pop %v786
        %v789 = vmul.f32 %v786, %v788
        %vm790 = vcmp.eq.f32.partialorder %v786, inf
        %v791 = vsel %vm790, %v786, %v789
        %vm792 = vcmp.eq.f32.partialorder %v786, 0.0
        %v793 = vand.u32 %v786, 2147483648
        %v794 = vsel %vm792, %v793, %v791
        %v795 = vrsqrt.pop %v787
        %v796 = vmul.f32 %v787, %v795
        %vm797 = vcmp.eq.f32.partialorder %v787, inf
        %v798 = vsel %vm797, %v787, %v796
        %vm799 = vcmp.eq.f32.partialorder %v787, 0.0
        %v800 = vand.u32 %v787, 2147483648
        %v801 = vsel %vm799, %v800, %v798
        %v802 = vmul.f32 %v643, %v794
        %v803 = vmul.f32 %v644, %v801
        %806 = vrot.lane.b32.xlu0 %v802, 96
        %v807 = vpop.permute.xlu0 %806
        %808 = vrot.lane.b32.xlu0 %v803, 96
        %v809 = vpop.permute.xlu0 %808
        %812 = vst.msk [vmem:[%s330] sm:$0xff] %vm501, %v807
        %813 = vst.msk [vmem:[%s330 + $0x8] sm:$0xff] %vm501, %v809
        %s814 = sand.u32 %s206, 1
        %s815 = scalar_lea.sflag [#allocation5], %s814
        %s816 = sand.u32 %s206, 1
        %s817 = smul.addr %s816, 16
        %s818 = scalar_lea.vmem [#allocation8], %s817
        // Predicated region
        $region61: #{tpu_custom_call.1} parent=51 // pred_check
          %p819 = pneg %p216
        $region62: #{tpu_custom_call.1} parent=51 // pred_check_branch
          %821 = sbr.rel (%p819) target = $region64
        $region63: #{tpu_custom_call.1} parent=51 // pred_region
          %s822 = smul.u32 2, %s25
          %s824 = ssub.s32 256, 256
          %825 = vsyncadd %s815, %s824
          %s826 = smul.addr %s822, 128
          %s827 = scalar_lea.hbm %s8, %s826
          %s828 = sshll.u32 %s818, 4
          %s829 = int_to_ptr.vmem [resolvable:$true] %s828
          %834 = dma.vmem_to_hbm [thread:$0]  %s829, 256, %s827, %s815, 128, 128, 8
        $region64: #{tpu_custom_call.1} parent=51 // pred_fallthru
          _
      $region52: #{tpu_custom_call.1} parent=5 // pred_fallthru
        _
      %p835 = scmp.le.s32.totalorder 2, %s20
      // Predicated region
      $region65: #{tpu_custom_call.1} parent=5 // pred_check
        %p836 = pneg %p835
      $region66: #{tpu_custom_call.1} parent=5 // pred_check_branch
        %838 = sbr.rel (%p836) target = $region68
      $region67: #{tpu_custom_call.1} parent=5 // pred_region
        %s839 = ssub.s32 %s20, 2
        // Predicated region
        $region69: #{tpu_custom_call.1} parent=67 // pred_check
          %p840 = pneg %p222
        $region70: #{tpu_custom_call.1} parent=67 // pred_check_branch
          %842 = sbr.rel (%p840) target = $region72
        $region71: #{tpu_custom_call.1} parent=67 // pred_region
          %s843 = sand.u32 %s207, 1
          %s844 = scalar_lea.sflag [#allocation5], %s843
          %s845 = sand.u32 %s207, 1
          %s846 = smul.addr %s845, 16
          %s847 = scalar_lea.vmem [#allocation8], %s846
          %848 = dma.done %s844, 256
        $region72: #{tpu_custom_call.1} parent=67 // pred_fallthru
          _
      $region68: #{tpu_custom_call.1} parent=5 // pred_fallthru
        _
    $region6: #{tpu_custom_call.1} parent=1 // loop_footer
      %s24 = sadd.s32 1, %s20
    $region7: #{tpu_custom_call.1} parent=1 // loop_footer_branch
      %19 = sbr.rel target = $region3
    $region8: #{tpu_custom_call.1} parent=1 // loop_exit
      _
    %849 = vsyncpa [#allocation4], 1
    %s850 = scalar_lea.sflag [#allocation4], 1
    %851 = vsyncpa %s850, 1
    %852 = vsyncpa [#allocation7], 1
    %853 = vsyncpa [#allocation5], 1
    %s854 = scalar_lea.sflag [#allocation5], 1
    %855 = vsyncpa %s854, 1

</llo_original>
